<compile_context>
chip_gen: v6e
topology: v6e:2x2x1
jax: 0.10.0
libtpu: 0.0.40
codegen_flags: <defaults>
</compile_context>

<pallas_src>
import functools

import jax
import jax.numpy as jnp
from jax import lax
from jax.experimental import pallas as pl
from jax.experimental.pallas import tpu as pltpu


def _series_decomp_kernel(x_ref, res_ref, mean_ref, *, n_vars):
    """One batch tile in the flattened [TB, C] layout, C = L * n_vars.

    The moving average along time (window 3, stride 1, one replicated timestep of
    padding per side) becomes +/- n_vars lane shifts of each flattened row, with the
    first / last timestep replicated at the edges via an iota mask.
    """
    xf = x_ref[...].astype(jnp.float32)                       # [TB, C]
    C = xf.shape[-1]
    N = n_vars

    lane = lax.broadcasted_iota(jnp.int32, xf.shape, 1)       # flat time*channel index
    # prev[f] = x[f - N] for f >= N, else x[f]   (replicate timestep 0)
    prev = jnp.where(lane < N, xf, pltpu.roll(xf, N, 1))
    # nxt[f]  = x[f + N] for f < C - N, else x[f] (replicate timestep L-1)
    nxt = jnp.where(lane >= C - N, xf, pltpu.roll(xf, C - N, 1))

    mean = (prev + xf + nxt) * (1.0 / 3.0)                    # reciprocal-multiply
    mean_ref[...] = mean.astype(mean_ref.dtype)
    res_ref[...] = (xf - mean).astype(res_ref.dtype)


def _vmem_capacity_bytes():
    """Per-core VMEM capacity; conservative fallback if the query is unavailable."""
    try:
        return int(pltpu.get_tpu_info().vmem_capacity_bytes)
    except Exception:
        return 64 * 1024 * 1024          # v7x per-TensorCore size (smallest of v5e/v6e/v7x)


def _pick_batch_tile(B, C, itemsize, budget_bytes):
    """Largest batch tile whose live VMEM footprint fits the budget.

    Per batch row: double-buffered input (2x) + two double-buffered outputs (4x) in
    the I/O dtype, plus ~5 f32 in-kernel temporaries (xf, prev, nxt, mean, res).
    """
    per_row = 6 * C * itemsize + 20 * C
    tb = max(1, budget_bytes // max(per_row, 1))
    # Keep >= ~4 grid steps for large batches so both v7x TensorCores stay busy
    # and DMA/compute pipelining has something to overlap.
    if B >= 16:
        tb = min(tb, -(-B // 4))
    if tb >= B:
        return int(B)
    tb = max(8, (tb // 8) * 8)           # keep the sublane (second-to-last) block dim 8-aligned
    return int(min(tb, B))
    # TODO(synk): add an L-tiling fallback with a 1-row halo for the (unrealistic for
    # FBM shapes) case where a single [L*N] row exceeds the VMEM budget.


@functools.partial(jax.jit, static_argnames=("kernel_size", "batch_tile"))
def series_decomp(x, kernel_size=3, batch_tile=None):
    """series_decomp.forward: x [B, L, N] -> (res, moving_mean), both [B, L, N]."""
    B, L, N = x.shape
    if kernel_size != 3:
        # TODO(synk): the module's (kernel_size-1)//2 padding is dead code (overwritten
        # by repeat(1,1,1)), so `res = x - moving_mean` only shape-checks for K == 3;
        # other kernel sizes cannot run in the original PyTorch module either.
        raise NotImplementedError("series_decomp (as written) requires kernel_size == 3")

    C = L * N
    itemsize = jnp.dtype(x.dtype).itemsize

    cap = _vmem_capacity_bytes()
    vmem_limit = min(int(cap * 0.55), 96 * 1024 * 1024)       # ~35 MiB on v7x, ~70 MiB on v5e/v6e
    if batch_tile is None:
        TB = _pick_batch_tile(B, C, itemsize, int(vmem_limit * 0.75))
    else:
        TB = int(min(max(int(batch_tile), 1), B))
    grid = (pl.cdiv(B, TB),)

    x2 = x.reshape(B, C)                 # free: collapses contiguous trailing dims
    kernel = functools.partial(_series_decomp_kernel, n_vars=N)

    res2, mean2 = pl.pallas_call(
        kernel,
        out_shape=(
            jax.ShapeDtypeStruct((B, C), x.dtype),
            jax.ShapeDtypeStruct((B, C), x.dtype),
        ),
        grid=grid,
        in_specs=[pl.BlockSpec((TB, C), lambda i: (i, 0))],
        out_specs=(
            pl.BlockSpec((TB, C), lambda i: (i, 0)),
            pl.BlockSpec((TB, C), lambda i: (i, 0)),
        ),
        compiler_params=pltpu.CompilerParams(
            dimension_semantics=("parallel",),
            vmem_limit_bytes=vmem_limit,
        ),
    )(x2)
    return res2.reshape(B, L, N), mean2.reshape(B, L, N)


def _reference(x, kernel_size=3):
    """Pure-JAX mirror of the PyTorch module (including its dead-code padding)."""
    front = x[:, :1, :]
    end = x[:, -1:, :]
    xp = jnp.concatenate([front, x, end], axis=1)             # [B, L+2, N]
    l_out = xp.shape[1] - kernel_size + 1
    mean = sum(xp[:, k:k + l_out, :] for k in range(kernel_size)) / kernel_size
    res = x - mean
    return res, mean


if __name__ == "__main__":
    B, L, N = 2, 16, 4        # batch, sequence length, variables/channels
    kernel_size = 3

    key = jax.random.PRNGKey(0)
    k0, k1 = jax.random.split(key)
    x = jax.random.normal(k0, (B, L, N), dtype=jnp.float32)

    res, mean = series_decomp(x, kernel_size=kernel_size)
    res, mean = jax.block_until_ready((res, mean))

    ref_res, ref_mean = _reference(x, kernel_size)
    assert res.shape == (B, L, N) and mean.shape == (B, L, N)
    assert jnp.allclose(mean, ref_mean, atol=1e-5, rtol=1e-5), "moving_mean mismatch"
    assert jnp.allclose(res, ref_res, atol=1e-5, rtol=1e-5), "res mismatch"

    # Ragged / multi-step grid check: batch not a multiple of the batch tile.
    B2 = 17
    x2 = jax.random.normal(k1, (B2, L, N), dtype=jnp.float32)
    res2, mean2 = series_decomp(x2, kernel_size=kernel_size, batch_tile=8)
    res2, mean2 = jax.block_until_ready((res2, mean2))
    ref_res2, ref_mean2 = _reference(x2, kernel_size)
    assert jnp.allclose(mean2, ref_mean2, atol=1e-5, rtol=1e-5), "ragged moving_mean mismatch"
    assert jnp.allclose(res2, ref_res2, atol=1e-5, rtol=1e-5), "ragged res mismatch"

    print("KERNEL_OK")
</pallas_src>

<mosaic_0001>
module attributes {stable_mosaic.version = 11 : i64} {
  func.func @_series_decomp_kernel(%arg0: i32, %arg1: memref<2x64xf32, #tpu.memory_space<vmem>>, %arg2: memref<2x64xf32, #tpu.memory_space<vmem>>, %arg3: memref<2x64xf32, #tpu.memory_space<vmem>>) attributes {dimension_semantics = [#tpu.dimension_semantics<parallel>], iteration_bounds = array<i64: 1>, scalar_prefetch = 0 : i64, scratch_operands = 0 : i64, tpu.core_type = #tpu.core_type<tc>, window_params = [{transform_indices = @transform_0, window_bounds = array<i64: 2, 64>}, {transform_indices = @transform_1, window_bounds = array<i64: 2, 64>}, {transform_indices = @transform_2, window_bounds = array<i64: 2, 64>}]} {
    %c0 = arith.constant 0 : index
    %c0_0 = arith.constant 0 : index
    %0 = vector.load %arg1[%c0, %c0_0] : memref<2x64xf32, #tpu.memory_space<vmem>>, vector<2x64xf32>
    %1 = tpu.iota {dimensions = array<i32: 1>} : vector<2x64xi32>
    %c4_i32 = arith.constant 4 : i32
    %2 = vector.broadcast %c4_i32 : i32 to vector<2x64xi32>
    %3 = arith.cmpi slt, %1, %2 : vector<2x64xi32>
    %c4_i32_1 = arith.constant 4 : i32
    %4 = tpu.dynamic_rotate %0 by %c4_i32_1 dim 1 : vector<2x64xf32>, i32 -> vector<2x64xf32>
    %5 = arith.select %3, %0, %4 : vector<2x64xi1>, vector<2x64xf32>
    %c60_i32 = arith.constant 60 : i32
    %6 = vector.broadcast %c60_i32 : i32 to vector<2x64xi32>
    %7 = arith.cmpi sge, %1, %6 : vector<2x64xi32>
    %c60_i32_2 = arith.constant 60 : i32
    %8 = tpu.dynamic_rotate %0 by %c60_i32_2 dim 1 : vector<2x64xf32>, i32 -> vector<2x64xf32>
    %9 = arith.select %7, %0, %8 : vector<2x64xi1>, vector<2x64xf32>
    %10 = arith.addf %5, %0 : vector<2x64xf32>
    %11 = arith.addf %10, %9 : vector<2x64xf32>
    %cst = arith.constant 0.333333343 : f32
    %12 = vector.broadcast %cst : f32 to vector<2x64xf32>
    %13 = arith.mulf %11, %12 : vector<2x64xf32>
    %c0_3 = arith.constant 0 : index
    %c0_4 = arith.constant 0 : index
    %14 = vector.load %arg3[%c0_3, %c0_4] : memref<2x64xf32, #tpu.memory_space<vmem>>, vector<2x64xf32>
    tpu.vector_store %arg3[%c0_3, %c0_4], %13 {strides = array<i32>} : memref<2x64xf32, #tpu.memory_space<vmem>>, vector<2x64xf32>,
    %15 = arith.subf %0, %13 : vector<2x64xf32>
    %c0_5 = arith.constant 0 : index
    %c0_6 = arith.constant 0 : index
    %16 = vector.load %arg2[%c0_5, %c0_6] : memref<2x64xf32, #tpu.memory_space<vmem>>, vector<2x64xf32>
    tpu.vector_store %arg2[%c0_5, %c0_6], %15 {strides = array<i32>} : memref<2x64xf32, #tpu.memory_space<vmem>>, vector<2x64xf32>,
    return
  }
  func.func @transform_0(%arg0: i32) -> (i32, i32) {
    %c0_i32 = arith.constant 0 : i32
    %c0_i32_0 = arith.constant 0 : i32
    return %arg0, %c0_i32 : i32, i32
  }
  func.func @transform_1(%arg0: i32) -> (i32, i32) {
    %c0_i32 = arith.constant 0 : i32
    %c0_i32_0 = arith.constant 0 : i32
    return %arg0, %c0_i32 : i32, i32
  }
  func.func @transform_2(%arg0: i32) -> (i32, i32) {
    %c0_i32 = arith.constant 0 : i32
    %c0_i32_0 = arith.constant 0 : i32
    return %arg0, %c0_i32 : i32, i32
  }
}

</mosaic_0001>

<llo_original>
// kernel: series_decomp.1
$region0: #{series_decomp.1}
  #allocation0 [shape = 'u32[]', space=smem, size = 0x4, offset = 0x4, fixed_abs, tag = 'smem constant byte address 0x4 - core index']
  #allocation1 [shape = 'u32[144,128]{1,0:T(1,128)}', space=vmem, size = 0x12000, scoped, tag = 'internal scratch']
  %s0 = inlined_call_operand.vmem [shape: f32[2,64], index: 0, kind: input, shape index: {}]
  %s1 = inlined_call_operand.vmem [shape: f32[2,64], index: 1, kind: output, shape index: {0}]
  %s2 = inlined_call_operand.vmem [shape: f32[2,64], index: 2, kind: output, shape index: {1}]
  %3 = xla_tuple %s1, %s2
  %s4 = sld [smem:[#allocation0]]
  $region22: #{series_decomp.1} parent=0
    _
  %s6 = ssub.s32 1, %s4
  %s7 = scalar_select 0, %s6, %s4
  // Predicated region
  $region2: #{series_decomp.1} parent=0 // pred_check
    _
  $region3: #{series_decomp.1} parent=0 // pred_check_branch
    %9 = sbr.rel (0) target = $region5
  $region4: #{series_decomp.1} parent=0 // pred_region
    _
  $region5: #{series_decomp.1} parent=0 // pred_fallthru
    _
  %v10 = vld [vmem:[%s0] sm:$0x3]
  %v11 = vlaneseq
  %v12 = vand.u32 %v11, 127
  %vm13 = vcmp.lt.s32.totalorder %v12, 4
  %vm14 = vcmask 1048064
  %15 = vrot.lane.b32.xlu0 %v10, 64
  %v16 = vpop.permute.xlu0 %15
  %v17 = vsel %vm14, %v16, %v10
  %18 = vrot.lane.b32.xlu0 %v17, 64
  %v19 = vpop.permute.xlu0 %18
  %v20 = vsel %vm14, %v19, %v10
  %22 = vrot.lane.b32.xlu0 %v20, 68
  %v23 = vpop.permute.xlu0 %22
  %v25 = vsel %vm13, %v10, %v23
  %vm26 = vcmp.ge.s32.totalorder %v12, 60
  %27 = vrot.lane.b32.xlu0 %v20, 124
  %v28 = vpop.permute.xlu0 %27
  %v30 = vsel %vm26, %v10, %v28
  %v31 = vadd.f32 %v25, %v10
  %v32 = vadd.f32 %v31, %v30
  %v33 = vmul.f32 %v32, 0.33333334
  %vm34 = vcmask 517120
  %35 = vst.msk [vmem:[%s2] sm:$0x3] %vm34, %v33
  %v36 = vsub.f32 %v10, %v33
  %37 = vst.msk [vmem:[%s1] sm:$0x3] %vm34, %v36
  // Predicated region
  $region6: #{series_decomp.1} parent=0 // pred_check
    _
  $region7: #{series_decomp.1} parent=0 // pred_check_branch
    %39 = sbr.rel (0) target = $region9
  $region8: #{series_decomp.1} parent=0 // pred_region
    _
  $region9: #{series_decomp.1} parent=0 // pred_fallthru
    _
  // Predicated region
  $region10: #{series_decomp.1} parent=0 // pred_check
    _
  $region11: #{series_decomp.1} parent=0 // pred_check_branch
    %41 = sbr.rel (0) target = $region13
  $region12: #{series_decomp.1} parent=0 // pred_region
    _
  $region13: #{series_decomp.1} parent=0 // pred_fallthru
    _
  // Predicated region
  $region14: #{series_decomp.1} parent=0 // pred_check
    _
  $region15: #{series_decomp.1} parent=0 // pred_check_branch
    %43 = sbr.rel (0) target = $region17
  $region16: #{series_decomp.1} parent=0 // pred_region
    _
  $region17: #{series_decomp.1} parent=0 // pred_fallthru
    _
  // Predicated region
  $region18: #{series_decomp.1} parent=0 // pred_check
    _
  $region19: #{series_decomp.1} parent=0 // pred_check_branch
    %45 = sbr.rel (0) target = $region21
  $region20: #{series_decomp.1} parent=0 // pred_region
    _
  $region21: #{series_decomp.1} parent=0 // pred_fallthru
    _

</llo_original>
